<compile_context>
chip_gen: v6e
topology: v6e:2x2x1
jax: 0.10.0
libtpu: 0.0.40
codegen_flags: <defaults>
</compile_context>

<pallas_src>
import math

import jax
import jax.numpy as jnp
from jax.experimental import pallas as pl
from jax.experimental.pallas import tpu as pltpu


_LANE = 128
_STEP_BYTES = 8 * 1024 * 1024      # target bytes of x per pipeline step (v7x roofline)
_ROW_TILE_CAP = 1024               # sublane-tile cap
_HW_ROW_BYTES_CAP = 16 * 1024      # per-row bytes per step -> 4096 f32 / 8192 bf16 lanes


def _cdiv(a, b):
    return -(-a // b)


def _round_up(x, m):
    return _cdiv(x, m) * m


def _plan_tiles(rows, hw, elem_bytes):
    """Pick (row_tile, rows_padded, hw_tile, hw_padded) for the streaming pool."""
    # Sublane packing unit: 8 rows for 4-byte dtypes, 16 for bf16, 32 for int8.
    su = max(8, 32 // max(elem_bytes, 1))

    # ---- lane (H*W) tiling: pad to a multiple of 128 and balance the tiles.
    hw128 = _round_up(hw, _LANE)
    hw_cap = max(_LANE, (_HW_ROW_BYTES_CAP // elem_bytes) // _LANE * _LANE)
    n_k = _cdiv(hw128, min(hw128, hw_cap))
    hw_tile = _round_up(_cdiv(hw128, n_k), _LANE)
    hw_padded = n_k * hw_tile

    # ---- row (N*C) tiling: fill the ~8 MiB/step budget and balance the tiles.
    budget_rows = max(su, (_STEP_BYTES // (hw_tile * elem_bytes)) // su * su)
    row_max = min(_ROW_TILE_CAP, budget_rows, _round_up(rows, su))
    n_r = _cdiv(rows, row_max)
    if n_r == 1 and rows >= 2 * su:
        # v7x megacore: keep the "parallel" row axis at >= 2 tiles when possible.
        n_r = 2
    row_tile = _round_up(_cdiv(rows, n_r), su)
    rows_padded = n_r * row_tile
    return row_tile, rows_padded, hw_tile, hw_padded


def _make_pool_kernel(inv_hw: float):
    def kernel(x_ref, o_ref, acc_ref):
        # x_ref:   (row_tile, hw_tile)  one spatial chunk of rows (n*C + c)
        # o_ref:   (row_tile, 1) f32    per-row spatial mean
        # acc_ref: (row_tile, 1) f32    running spatial sum
        k = pl.program_id(1)

        @pl.when(k == 0)
        def _init():
            acc_ref[...] = jnp.zeros_like(acc_ref)

        # Partial sum over this HW tile, accumulated in f32 (zero padding is
        # sum-safe; the mean uses the true H*W via inv_hw).
        acc_ref[...] += jnp.sum(
            x_ref[...], axis=-1, keepdims=True, dtype=jnp.float32
        )

        @pl.when(k == pl.num_programs(1) - 1)
        def _finalize():
            o_ref[...] = acc_ref[...] * inv_hw

    return kernel


def channel_attention(x, weight):
    """x: (N, C, H, W), weight: (C, C, 1, 1) -> (N, C, 1, 1)."""
    N, C, H, W = x.shape
    rows, hw = N * C, H * W
    elem_bytes = jnp.dtype(x.dtype).itemsize

    row_tile, rows_padded, hw_tile, hw_padded = _plan_tiles(rows, hw, elem_bytes)

    x2d = x.reshape(rows, hw)  # sublane-dense layout (rows = N*C)
    if rows_padded != rows or hw_padded != hw:
        x2d = jnp.pad(x2d, ((0, rows_padded - rows), (0, hw_padded - hw)))

    kernel = _make_pool_kernel(1.0 / float(hw))

    pooled = pl.pallas_call(
        kernel,
        out_shape=jax.ShapeDtypeStruct((rows_padded, 1), jnp.float32),
        grid_spec=pltpu.PrefetchScalarGridSpec(
            num_scalar_prefetch=0,
            grid=(rows_padded // row_tile, hw_padded // hw_tile),
            in_specs=[pl.BlockSpec((row_tile, hw_tile), lambda r, k: (r, k))],
            out_specs=pl.BlockSpec((row_tile, 1), lambda r, k: (r, 0)),
            scratch_shapes=[pltpu.VMEM((row_tile, 1), jnp.float32)],
        ),
        compiler_params=pltpu.CompilerParams(
            dimension_semantics=("parallel", "arbitrary"),
            vmem_limit_bytes=32 * 1024 * 1024,
        ),
    )(x2d)

    # Tiny epilogue (per perf review): the 1x1 conv (no bias) + ReLU is only
    # N*C*C flops, so it runs as a fused XLA op on the pooled means instead of
    # a degenerate in-kernel MXU matvec against a kron(I, W) operand.
    pooled_nc = pooled[:rows, 0].reshape(N, C)
    w2d = weight.reshape(C, C).astype(jnp.float32)
    out = jnp.maximum(pooled_nc @ w2d.T, 0.0).astype(x.dtype)
    return out.reshape(N, C, 1, 1)


if __name__ == "__main__":
    key = jax.random.PRNGKey(0)
    kx, kw = jax.random.split(key)

    N, C, H, W = 2, 4, 16, 16  # in_planes = 4
    x = jax.random.normal(kx, (N, C, H, W), dtype=jnp.float32)

    # fc1 = nn.Conv2d(in_planes, in_planes, 1, bias=False) -> weight (C, C, 1, 1)
    fan_in = C * 1 * 1
    bound = 1.0 / math.sqrt(fan_in)
    weight = jax.random.uniform(
        kw, (C, C, 1, 1), dtype=jnp.float32, minval=-bound, maxval=bound
    )

    out = jax.block_until_ready(channel_attention(x, weight))

    # Reference check in plain JAX.
    pooled_ref = jnp.mean(x, axis=(2, 3))                        # (N, C)
    out_ref = jnp.maximum(pooled_ref @ weight.reshape(C, C).T, 0.0)
    assert out.shape == (N, C, 1, 1)
    assert jnp.allclose(out.reshape(N, C), out_ref, atol=1e-5, rtol=1e-5)

    print("KERNEL_OK")
</pallas_src>

<mosaic_0001>
module attributes {stable_mosaic.version = 11 : i64} {
  func.func @kernel(%arg0: i32, %arg1: i32, %arg2: memref<8x256xf32, #tpu.memory_space<vmem>>, %arg3: memref<8x1xf32, #tpu.memory_space<vmem>>, %arg4: memref<8x1xf32, #tpu.memory_space<vmem>>) attributes {dimension_semantics = [#tpu.dimension_semantics<parallel>, #tpu.dimension_semantics<arbitrary>], iteration_bounds = array<i64: 1, 1>, scalar_prefetch = 0 : i64, scratch_operands = 1 : i64, tpu.core_type = #tpu.core_type<tc>, window_params = [{transform_indices = @transform_0, window_bounds = array<i64: 8, 256>}, {transform_indices = @transform_1, window_bounds = array<i64: 8, 1>}]} {
    %c0_i32 = arith.constant 0 : i32
    %0 = arith.cmpi eq, %arg1, %c0_i32 : i32
    %1 = arith.extui %0 : i1 to i32
    %c0_i32_0 = arith.constant 0 : i32
    %2 = arith.cmpi ne, %1, %c0_i32_0 : i32
    scf.if %2 {
      %cst_8 = arith.constant 0.000000e+00 : f32
      %12 = vector.broadcast %cst_8 : f32 to vector<8x1xf32>
      %c0_9 = arith.constant 0 : index
      %c0_10 = arith.constant 0 : index
      %13 = vector.load %arg4[%c0_9, %c0_10] : memref<8x1xf32, #tpu.memory_space<vmem>>, vector<8x1xf32>
      tpu.vector_store %arg4[%c0_9, %c0_10], %12 {strides = array<i32>} : memref<8x1xf32, #tpu.memory_space<vmem>>, vector<8x1xf32>,
    } else {
    }
    %c0 = arith.constant 0 : index
    %c0_1 = arith.constant 0 : index
    %3 = vector.load %arg4[%c0, %c0_1] : memref<8x1xf32, #tpu.memory_space<vmem>>, vector<8x1xf32>
    %c0_2 = arith.constant 0 : index
    %c0_3 = arith.constant 0 : index
    %4 = vector.load %arg2[%c0_2, %c0_3] : memref<8x256xf32, #tpu.memory_space<vmem>>, vector<8x256xf32>
    %cst = arith.constant dense<0.000000e+00> : vector<8xf32>
    %5 = vector.multi_reduction <add>, %4, %cst [1] : vector<8x256xf32> to vector<8xf32>
    %6 = vector.shape_cast %5 : vector<8xf32> to vector<8x1xf32>
    %7 = arith.addf %3, %6 : vector<8x1xf32>
    %c0_4 = arith.constant 0 : index
    %c0_5 = arith.constant 0 : index
    %8 = vector.load %arg4[%c0_4, %c0_5] : memref<8x1xf32, #tpu.memory_space<vmem>>, vector<8x1xf32>
    tpu.vector_store %arg4[%c0_4, %c0_5], %7 {strides = array<i32>} : memref<8x1xf32, #tpu.memory_space<vmem>>, vector<8x1xf32>,
    %c0_i32_6 = arith.constant 0 : i32
    %9 = arith.cmpi eq, %arg1, %c0_i32_6 : i32
    %10 = arith.extui %9 : i1 to i32
    %c0_i32_7 = arith.constant 0 : i32
    %11 = arith.cmpi ne, %10, %c0_i32_7 : i32
    scf.if %11 {
      %c0_8 = arith.constant 0 : index
      %c0_9 = arith.constant 0 : index
      %12 = vector.load %arg4[%c0_8, %c0_9] : memref<8x1xf32, #tpu.memory_space<vmem>>, vector<8x1xf32>
      %cst_10 = arith.constant 3.906250e-03 : f32
      %13 = vector.broadcast %cst_10 : f32 to vector<8x1xf32>
      %14 = arith.mulf %12, %13 : vector<8x1xf32>
      %c0_11 = arith.constant 0 : index
      %c0_12 = arith.constant 0 : index
      %15 = vector.load %arg3[%c0_11, %c0_12] : memref<8x1xf32, #tpu.memory_space<vmem>>, vector<8x1xf32>
      tpu.vector_store %arg3[%c0_11, %c0_12], %14 {strides = array<i32>} : memref<8x1xf32, #tpu.memory_space<vmem>>, vector<8x1xf32>,
    } else {
    }
    return
  }
  func.func @transform_0(%arg0: i32, %arg1: i32) -> (i32, i32) {
    %c0_i32 = arith.constant 0 : i32
    return %arg0, %arg1 : i32, i32
  }
  func.func @transform_1(%arg0: i32, %arg1: i32) -> (i32, i32) {
    %c0_i32 = arith.constant 0 : i32
    %c0_i32_0 = arith.constant 0 : i32
    return %arg0, %c0_i32 : i32, i32
  }
}

</mosaic_0001>

<llo_original>
// kernel: tpu_custom_call.1
$region0: #{tpu_custom_call.1}
  #allocation0 [shape = 'u32[]', space=smem, size = 0x4, offset = 0x4, fixed_abs, tag = 'smem constant byte address 0x4 - core index']
  #allocation1 [shape = 'u32[144,128]{1,0:T(1,128)}', space=vmem, size = 0x12000, scoped, tag = 'internal scratch']
  #allocation2 [shape = 'f32[8,1]{1,0:T(8,128)}', space=vmem, size = 0x1000, scoped, tag = 'scratch operand']
  %s0 = inlined_call_operand.hbm [shape: f32[8,256], index: 0, kind: input, shape index: {}]
  %s1 = inlined_call_operand.vmem [shape: f32[8,1], index: 1, kind: output, shape index: {}]
  %s2 = sld [smem:[#allocation0]]
  $region26: #{tpu_custom_call.1} parent=0
    _
  %s4 = ssub.s32 1, %s2
  %s5 = scalar_select 0, %s4, %s2
  $region1: #{tpu_custom_call.1} parent=0
    #allocation3 [shape = 'u8[8192]{0}', space=vmem, size = 0x2000, scoped, tag = 'input window, operand 0, single buffered']
    #allocation4 [shape = 's32[1]{0}', space=sflag, size = 0x4, scoped, tag = 'scoped memory for tpu_custom_call.1']
    %6 = vsyncpa [#allocation4], 0
    // Predicated region
    $region2: #{tpu_custom_call.1} parent=1 // pred_check
      _
    $region3: #{tpu_custom_call.1} parent=1 // pred_check_branch
      %8 = sbr.rel (0) target = $region5
    $region4: #{tpu_custom_call.1} parent=1 // pred_region
      %s10 = ssub.s32 256, 256
      %11 = vsyncadd [#allocation4], %s10
      %s13 = sshll.u32 [#allocation3], 4
      %s14 = int_to_ptr.vmem [resolvable:$true] %s13
      %16 = dma.hbm_to_vmem [thread:$0]  %s0, 256, %s14, [#allocation4]
    $region5: #{tpu_custom_call.1} parent=1 // pred_fallthru
      _
    // Predicated region
    $region6: #{tpu_custom_call.1} parent=1 // pred_check
      _
    $region7: #{tpu_custom_call.1} parent=1 // pred_check_branch
      %18 = sbr.rel (0) target = $region9
    $region8: #{tpu_custom_call.1} parent=1 // pred_region
      %19 = dma.done [#allocation4], 256
    $region9: #{tpu_custom_call.1} parent=1 // pred_fallthru
      _
    %p20 = scmp.eq.s32.totalorder 0, 0
    // Predicated region
    $region10: #{tpu_custom_call.1} parent=1 // pred_check
      %p21 = pneg %p20
    $region11: #{tpu_custom_call.1} parent=1 // pred_check_branch
      %23 = sbr.rel (%p21) target = $region13
    $region12: #{tpu_custom_call.1} parent=1 // pred_region
      %vm24 = vcmask 7168
      %25 = vst.msk [vmem:[#allocation2] sm:$0xff] %vm24, 0.0
    $region13: #{tpu_custom_call.1} parent=1 // pred_fallthru
      _
    %v26 = vld [vmem:[#allocation2] sm:$0xff]
    %v27 = vld [vmem:[#allocation3] sm:$0xff]
    %v28 = vld [vmem:[#allocation3 + $0x8] sm:$0xff]
    %v29 = vadd.f32 %v27, %v28
    %30 = vadd.xlane.f32.xlu0 %v29
    %v31 = vpop.xlane.xlu0 %30
    %v32 = vadd.f32 %v26, %v31
    %vm33 = vcmask 7168
    %34 = vst.msk [vmem:[#allocation2] sm:$0xff] %vm33, %v32
    // Predicated region
    $region14: #{tpu_custom_call.1} parent=1 // pred_check
      %p35 = pneg %p20
    $region15: #{tpu_custom_call.1} parent=1 // pred_check_branch
      %37 = sbr.rel (%p35) target = $region17
    $region16: #{tpu_custom_call.1} parent=1 // pred_region
      %v38 = vld [vmem:[#allocation2] sm:$0xff]
      %v39 = vmul.f32 %v38, 0.00390625
      %40 = vst.msk [vmem:[%s1] sm:$0xff] %vm33, %v39
    $region17: #{tpu_custom_call.1} parent=1 // pred_fallthru
      _
    // Predicated region
    $region18: #{tpu_custom_call.1} parent=1 // pred_check
      _
    $region19: #{tpu_custom_call.1} parent=1 // pred_check_branch
      %42 = sbr.rel (0) target = $region21
    $region20: #{tpu_custom_call.1} parent=1 // pred_region
      _
    $region21: #{tpu_custom_call.1} parent=1 // pred_fallthru
      _
    // Predicated region
    $region22: #{tpu_custom_call.1} parent=1 // pred_check
      _
    $region23: #{tpu_custom_call.1} parent=1 // pred_check_branch
      %44 = sbr.rel (0) target = $region25
    $region24: #{tpu_custom_call.1} parent=1 // pred_region
      _
    $region25: #{tpu_custom_call.1} parent=1 // pred_fallthru
      _
    %45 = vsyncpa [#allocation4], 1

</llo_original>
